<compile_context>
chip_gen: v7x
topology: tpu7x:2x2x1
jax: 0.10.0
libtpu: 0.0.40
codegen_flags: <defaults>
</compile_context>

<pallas_src>
import jax
import jax.numpy as jnp
from jax.experimental import pallas as pl
from jax.experimental.pallas import tpu as pltpu


def conv1x1_kernel(x_ref, w_ref, b_ref, o_ref):
    # x_ref: VMEM (C_in, N*HW)   -- fused batch, lane dim multiple of 128
    # w_ref: VMEM (C_out, C_in)
    # b_ref: VMEM (C_out, 1)     -- bias with t1 already folded in
    # o_ref: VMEM (C_out, N*HW)
    y = jnp.dot(w_ref[...], x_ref[...], preferred_element_type=jnp.float32)
    o_ref[...] = y + b_ref[...]


def conv1x1_pad1_add(x, w, b, t1):
    """Conv2d(C_in, C_out, kernel_size=1, stride=1, padding=1) + t1.

    x: (N, C_in, H, W) float32 (NCHW, as in PyTorch)
    w: (C_out, C_in) float32    (1x1 kernel squeezed)
    b: (C_out,) float32
    t1: scalar
    returns (N, C_out, H+2, W+2) float32
    """
    N, C_in, H, W = x.shape
    C_out = w.shape[0]
    HW = H * W

    # Fuse batch into the lane dim: (C_in, N*HW).  N*HW = 512 is a multiple of
    # 128, so stores are unmasked and the MXU gets one wide RHS push.
    x2d = jnp.transpose(x.reshape(N, C_in, HW), (1, 0, 2)).reshape(C_in, N * HW)

    # Fold t1 into the bias (touches only C_out elements; free in the wrapper).
    b2d = (b + jnp.asarray(t1, dtype=jnp.float32)).reshape(C_out, 1)

    # Single grid step: whole problem (~70 KB) fits in VMEM on every TPU gen.
    out2d = pl.pallas_call(
        conv1x1_kernel,
        out_shape=jax.ShapeDtypeStruct((C_out, N * HW), jnp.float32),
        in_specs=[
            pl.BlockSpec((C_in, N * HW), lambda: (0, 0)),
            pl.BlockSpec((C_out, C_in), lambda: (0, 0)),
            pl.BlockSpec((C_out, 1), lambda: (0, 0)),
        ],
        out_specs=pl.BlockSpec((C_out, N * HW), lambda: (0, 0)),
    )(x2d, w, b2d)

    # Back to (N, C_out, H, W).
    inner = jnp.transpose(out2d.reshape(C_out, N, HW), (1, 0, 2)).reshape(
        N, C_out, H, W)

    # padding=1 with a 1x1 kernel: the border sees zero input, so the output
    # there is exactly bias + t1 per channel.  Fill it in the wrapper.
    Hp, Wp = H + 2, W + 2
    border_val = (b + jnp.asarray(t1, dtype=jnp.float32)).reshape(1, C_out, 1, 1)
    out_full = jnp.broadcast_to(border_val, (N, C_out, Hp, Wp))
    out_full = jax.lax.dynamic_update_slice(out_full, inner, (0, 0, 1, 1))
    return out_full


if __name__ == "__main__":
    key = jax.random.PRNGKey(0)
    k_x, k_w, k_b = jax.random.split(key, 3)

    # Small shapes consistent with the module: C_in=17, C_out=10 fixed by the
    # conv; batch=2, spatial=16.
    N, C_in, C_out, H, W = 2, 17, 10, 16, 16
    x = jax.random.normal(k_x, (N, C_in, H, W), dtype=jnp.float32)
    bound = 1.0 / (C_in ** 0.5)
    w = jax.random.uniform(k_w, (C_out, C_in), jnp.float32, -bound, bound)
    b = jax.random.uniform(k_b, (C_out,), jnp.float32, -bound, bound)
    t1 = 1.0

    out = conv1x1_pad1_add(x, w, b, t1)
    out = jax.block_until_ready(out)

    # Reference check in plain JAX (same semantics as the PyTorch module).
    xp = jnp.pad(x, ((0, 0), (0, 0), (1, 1), (1, 1)))
    ref = jnp.einsum("oc,nchw->nohw", w, xp) + b[None, :, None, None] + t1
    assert out.shape == (N, C_out, H + 2, W + 2)
    assert jnp.allclose(out, ref, atol=1e-5, rtol=1e-5)

    print("KERNEL_OK")
</pallas_src>

<mosaic_0001>
module attributes {stable_mosaic.version = 11 : i64} {
  func.func @conv1x1_kernel(%arg0: memref<17x512xf32, #tpu.memory_space<vmem>>, %arg1: memref<10x17xf32, #tpu.memory_space<vmem>>, %arg2: memref<10x1xf32, #tpu.memory_space<vmem>>, %arg3: memref<10x512xf32, #tpu.memory_space<vmem>>) attributes {dimension_semantics = [], scalar_prefetch = 0 : i64, scratch_operands = 0 : i64, tpu.core_type = #tpu.core_type<tc>} {
    %c0 = arith.constant 0 : index
    %c0_0 = arith.constant 0 : index
    %0 = vector.load %arg1[%c0, %c0_0] : memref<10x17xf32, #tpu.memory_space<vmem>>, vector<10x17xf32>
    %c0_1 = arith.constant 0 : index
    %c0_2 = arith.constant 0 : index
    %1 = vector.load %arg0[%c0_1, %c0_2] : memref<17x512xf32, #tpu.memory_space<vmem>>, vector<17x512xf32>
    %cst = arith.constant dense<0.000000e+00> : vector<10x512xf32>
    %2 = tpu.matmul %0, %1, %cst {dimension_numbers = #tpu.dot_dimension_numbers<[1], [0], [0], [1], [0, 0, 1, 1], [], []>} : vector<10x17xf32>, vector<17x512xf32>, vector<10x512xf32> -> vector<10x512xf32>
    %c0_3 = arith.constant 0 : index
    %c0_4 = arith.constant 0 : index
    %3 = vector.load %arg2[%c0_3, %c0_4] : memref<10x1xf32, #tpu.memory_space<vmem>>, vector<10x1xf32>
    %4 = vector.broadcast %3 : vector<10x1xf32> to vector<10x512xf32>
    %5 = arith.addf %2, %4 : vector<10x512xf32>
    %c0_5 = arith.constant 0 : index
    %c0_6 = arith.constant 0 : index
    %6 = vector.load %arg3[%c0_5, %c0_6] : memref<10x512xf32, #tpu.memory_space<vmem>>, vector<10x512xf32>
    tpu.vector_store %arg3[%c0_5, %c0_6], %5 {strides = array<i32>} : memref<10x512xf32, #tpu.memory_space<vmem>>, vector<10x512xf32>,
    return
  }
}

</mosaic_0001>

<llo_original>
// kernel: tpu_custom_call.1
$region0: #{tpu_custom_call.1}
  #allocation0 [shape = 'u32[]', space=smem, size = 0x4, offset = 0x4, fixed_abs, tag = 'smem constant byte address 0x4 - core index']
  #allocation1 [shape = 'u32[144,128]{1,0:T(1,128)}', space=vmem, size = 0x12000, scoped, tag = 'internal scratch']
  %s0 = inlined_call_operand.hbm [shape: f32[17,512], index: 0, kind: input, shape index: {}]
  %s1 = inlined_call_operand.vmem [shape: f32[10,17], index: 1, kind: input, shape index: {}]
  %s2 = inlined_call_operand.vmem [shape: f32[10,1], index: 2, kind: input, shape index: {}]
  %s3 = inlined_call_operand.hbm [shape: f32[10,512], index: 3, kind: output, shape index: {}]
  %s4 = sld [smem:[#allocation0]]
  $region26: #{tpu_custom_call.1} parent=0
    _
  %s6 = ssub.s32 1, %s4
  %s7 = scalar_select 0, %s6, %s4
  $region1: #{tpu_custom_call.1} parent=0
    #allocation2 [shape = 'u8[49152]{0}', space=vmem, size = 0xc000, scoped, tag = 'input window, operand 0, single buffered']
    #allocation3 [shape = 's32[1]{0}', space=sflag, size = 0x4, scoped, tag = 'scoped memory for tpu_custom_call.1']
    #allocation4 [shape = 's32[1]{0}', space=sflag, size = 0x4, scoped, tag = 'scoped memory for tpu_custom_call.1']
    #allocation5 [shape = 'u8[32768]{0}', space=vmem, size = 0x8000, scoped, tag = 'output window, operand 0, single buffered']
    %8 = vsyncpa [#allocation3], 0
    %9 = vsyncpa [#allocation4], 0
    // Predicated region
    $region2: #{tpu_custom_call.1} parent=1 // pred_check
      _
    $region3: #{tpu_custom_call.1} parent=1 // pred_check_branch
      %11 = sbr.rel (0) target = $region5
    $region4: #{tpu_custom_call.1} parent=1 // pred_region
      %s13 = ssub.s32 1536, 1536
      %14 = vsyncadd [#allocation3], %s13
      %s15 = sshll.u32 [#allocation2], 4
      %s16 = int_to_ptr.vmem [resolvable:$true] %s15
      %21 = dma.hbm_to_vmem [thread:$0]  %s0, 1536, %s16, [#allocation3], 512, 512, 32
    $region5: #{tpu_custom_call.1} parent=1 // pred_fallthru
      _
    // Predicated region
    $region6: #{tpu_custom_call.1} parent=1 // pred_check
      _
    $region7: #{tpu_custom_call.1} parent=1 // pred_check_branch
      %23 = sbr.rel (0) target = $region9
    $region8: #{tpu_custom_call.1} parent=1 // pred_region
      _
    $region9: #{tpu_custom_call.1} parent=1 // pred_fallthru
      _
    // Predicated region
    $region10: #{tpu_custom_call.1} parent=1 // pred_check
      _
    $region11: #{tpu_custom_call.1} parent=1 // pred_check_branch
      %25 = sbr.rel (0) target = $region13
    $region12: #{tpu_custom_call.1} parent=1 // pred_region
      _
    $region13: #{tpu_custom_call.1} parent=1 // pred_fallthru
      _
    // Predicated region
    $region14: #{tpu_custom_call.1} parent=1 // pred_check
      _
    $region15: #{tpu_custom_call.1} parent=1 // pred_check_branch
      %27 = sbr.rel (0) target = $region17
    $region16: #{tpu_custom_call.1} parent=1 // pred_region
      %28 = dma.done [#allocation3], 1536
    $region17: #{tpu_custom_call.1} parent=1 // pred_fallthru
      _
    %v29 = vld [vmem:[%s1] sm:$0xff]
    %v30 = vld [vmem:[%s1 + $0x8] sm:$0x3]
    %v31 = vld [vmem:[#allocation2] sm:$0xff]
    %v32 = vld [vmem:[#allocation2 + $0x8] sm:$0xff]
    %v33 = vld [vmem:[#allocation2 + $0x10] sm:$0xff]
    %v34 = vld [vmem:[#allocation2 + $0x18] sm:$0xff]
    %v35 = vld [vmem:[#allocation2 + $0x20] sm:$0xff]
    %v36 = vld [vmem:[#allocation2 + $0x28] sm:$0xff]
    %v37 = vld [vmem:[#allocation2 + $0x30] sm:$0xff]
    %v38 = vld [vmem:[#allocation2 + $0x38] sm:$0xff]
    %v39 = vld [vmem:[#allocation2 + $0x40] sm:$0x1]
    %v40 = vld [vmem:[#allocation2 + $0x48] sm:$0x1]
    %v41 = vld [vmem:[#allocation2 + $0x50] sm:$0x1]
    %v42 = vld [vmem:[#allocation2 + $0x58] sm:$0x1]
    %v43 = vld [vmem:[%s2] sm:$0xff]
    %v44 = vld [vmem:[%s2 + $0x8] sm:$0x3]
    %46 = vset.pattern.permute.xlu0 0
    %47 = vperm.xlu0 %46, %v43
    %v48 = vpop.permute.xlu0 %47
    %51 = vset.pattern.permute.xlu0 0
    %52 = vperm.xlu0 %51, %v44
    %v53 = vpop.permute.xlu0 %52
    %vm55 = vcmask 138240
    %v57 = vsel %vm55, %v29, 0
    %v60 = vsel %vm55, %v30, 0
    %vm62 = vcmask 1040384
    %v64 = vsel %vm62, %v39, 0
    %v67 = vsel %vm62, %v40, 0
    %v70 = vsel %vm62, %v41, 0
    %v73 = vsel %vm62, %v42, 0
    %75 = vmatprep.subr.mxu0 %v32
    %76 = vmatpush1.msra.mxu0 %v31
    %77 = vmatprep.subr.mxu0 %v36
    %78 = vmatpush1.msra.mxu0 %v35
    %79 = vmatprep.subr.mxu0 %v67
    %80 = vmatpush1.msra.mxu0 %v64
    %81 = vmatprep.subr.mxu0 0.0
    %82 = vmatpush1.msra.mxu0 0.0
    %83 = vmatprep.subr.mxu0 0.0
    %84 = vmatpush1.msra.mxu0 0.0
    %85 = vmatprep.subr.mxu0 0.0
    %86 = vmatpush1.msra.mxu0 0.0
    %87 = vmatprep.subr.mxu0 0.0
    %88 = vmatpush1.msra.mxu0 0.0
    %89 = vmatprep.subr.mxu0 0.0
    %90 = vmatpush1.msra.mxu0 0.0
    %91 = vmatprep.subr.mxu0 0.0
    %92 = vmatpush1.msra.mxu0 0.0
    %93 = vmatprep.subr.mxu0 0.0
    %94 = vmatpush1.msra.mxu0 0.0
    %95 = vmatprep.subr.mxu0 0.0
    %96 = vmatpush1.msra.mxu0 0.0
    %97 = vmatprep.subr.mxu0 0.0
    %98 = vmatpush1.msra.mxu0 0.0
    %99 = vmatprep.subr.mxu0 0.0
    %100 = vmatpush1.msra.mxu0 0.0
    %101 = vmatprep.subr.mxu0 0.0
    %102 = vmatpush1.msra.mxu0 0.0
    %103 = vmatprep.subr.mxu0 0.0
    %104 = vmatpush1.msra.mxu0 0.0
    %105 = vmatprep.subr.mxu0 0.0
    %106 = vmatpush1.msra.mxu0 0.0
    %107 = vmatprep.subr.mxu0 0.0
    %108 = vmatpush1.msra.mxu0 0.0
    %109 = vmatprep.subr.mxu0 0.0
    %110 = vmatpush1.msra.mxu0 0.0
    %111 = vmatprep.subr.mxu0 0.0
    %112 = vmatpush1.msra.mxu0 0.0
    %113 = vmatprep.subr.mxu0 0.0
    %114 = vmatpush1.msra.mxu0 0.0
    %115 = vmatprep.subr.mxu0 0.0
    %116 = vmatpush1.msra.mxu0 0.0
    %117 = vmatprep.subr.mxu0 0.0
    %118 = vmatpush1.msra.mxu0 0.0
    %119 = vmatprep.subr.mxu0 0.0
    %120 = vmatpush1.msra.mxu0 0.0
    %121 = vmatprep.subr.mxu0 0.0
    %122 = vmatpush1.msra.mxu0 0.0
    %123 = vmatprep.subr.mxu0 0.0
    %124 = vmatpush1.msra.mxu0 0.0
    %125 = vmatprep.subr.mxu0 0.0
    %126 = vmatpush1.msra.mxu0 0.0
    %127 = vmatprep.subr.mxu0 0.0
    %128 = vmatpush1.msra.mxu0 0.0
    %129 = vmatprep.subr.mxu0 0.0
    %130 = vmatpush1.msra.mxu0 0.0
    %131 = vmatprep.subr.mxu0 0.0
    %132 = vmatpush1.msra.mxu0 0.0
    %133 = vmatprep.subr.mxu0 0.0
    %134 = vmatpush1.msra.mxu0 0.0
    %135 = vmatprep.subr.mxu0 0.0
    %136 = vmatpush1.msra.mxu0 0.0
    %137 = vmatprep.subr.mxu0 0.0
    %138 = vmatpush1.msra.mxu0 0.0
    %139 = vmatprep.mubr.f32.mxu0 0.0
    %140 = vmatmul.mubr.f32.gmra.mrb[0].mxu0 %v57
    %v141 = vpop.f32.mrb[0].mxu0
    %v142 = vadd.f32 %v48, %v141
    %v143 = vpop.f32.mrb[0].mxu0
    %v144 = vadd.f32 %v48, %v143
    %145 = vmatprep.mubr.f32.mxu0 0.0
    %146 = vmatmul.mubr.f32.gmra.mrb[0].mxu0 %v60
    %v147 = vpop.f32.mrb[0].mxu0
    %v148 = vadd.f32 %v53, %v147
    %v149 = vpop.f32.mrb[0].mxu0
    %v150 = vadd.f32 %v53, %v149
    %151 = vdwg.mxu0
    %152 = vmatprep.subr.mxu0 %v34
    %153 = vmatpush1.msra.mxu0 %v33
    %154 = vmatprep.subr.mxu0 %v38
    %155 = vmatpush1.msra.mxu0 %v37
    %156 = vmatprep.subr.mxu0 %v73
    %157 = vmatpush1.msra.mxu0 %v70
    %158 = vmatprep.subr.mxu0 0.0
    %159 = vmatpush1.msra.mxu0 0.0
    %160 = vmatprep.subr.mxu0 0.0
    %161 = vmatpush1.msra.mxu0 0.0
    %162 = vmatprep.subr.mxu0 0.0
    %163 = vmatpush1.msra.mxu0 0.0
    %164 = vmatprep.subr.mxu0 0.0
    %165 = vmatpush1.msra.mxu0 0.0
    %166 = vmatprep.subr.mxu0 0.0
    %167 = vmatpush1.msra.mxu0 0.0
    %168 = vmatprep.subr.mxu0 0.0
    %169 = vmatpush1.msra.mxu0 0.0
    %170 = vmatprep.subr.mxu0 0.0
    %171 = vmatpush1.msra.mxu0 0.0
    %172 = vmatprep.subr.mxu0 0.0
    %173 = vmatpush1.msra.mxu0 0.0
    %174 = vmatprep.subr.mxu0 0.0
    %175 = vmatpush1.msra.mxu0 0.0
    %176 = vmatprep.subr.mxu0 0.0
    %177 = vmatpush1.msra.mxu0 0.0
    %178 = vmatprep.subr.mxu0 0.0
    %179 = vmatpush1.msra.mxu0 0.0
    %180 = vmatprep.subr.mxu0 0.0
    %181 = vmatpush1.msra.mxu0 0.0
    %182 = vmatprep.subr.mxu0 0.0
    %183 = vmatpush1.msra.mxu0 0.0
    %184 = vmatprep.subr.mxu0 0.0
    %185 = vmatpush1.msra.mxu0 0.0
    %186 = vmatprep.subr.mxu0 0.0
    %187 = vmatpush1.msra.mxu0 0.0
    %188 = vmatprep.subr.mxu0 0.0
    %189 = vmatpush1.msra.mxu0 0.0
    %190 = vmatprep.subr.mxu0 0.0
    %191 = vmatpush1.msra.mxu0 0.0
    %192 = vmatprep.subr.mxu0 0.0
    %193 = vmatpush1.msra.mxu0 0.0
    %194 = vmatprep.subr.mxu0 0.0
    %195 = vmatpush1.msra.mxu0 0.0
    %196 = vmatprep.subr.mxu0 0.0
    %197 = vmatpush1.msra.mxu0 0.0
    %198 = vmatprep.subr.mxu0 0.0
    %199 = vmatpush1.msra.mxu0 0.0
    %200 = vmatprep.subr.mxu0 0.0
    %201 = vmatpush1.msra.mxu0 0.0
    %202 = vmatprep.subr.mxu0 0.0
    %203 = vmatpush1.msra.mxu0 0.0
    %204 = vmatprep.subr.mxu0 0.0
    %205 = vmatpush1.msra.mxu0 0.0
    %206 = vmatprep.subr.mxu0 0.0
    %207 = vmatpush1.msra.mxu0 0.0
    %208 = vmatprep.subr.mxu0 0.0
    %209 = vmatpush1.msra.mxu0 0.0
    %210 = vmatprep.subr.mxu0 0.0
    %211 = vmatpush1.msra.mxu0 0.0
    %212 = vmatprep.subr.mxu0 0.0
    %213 = vmatpush1.msra.mxu0 0.0
    %214 = vmatprep.subr.mxu0 0.0
    %215 = vmatpush1.msra.mxu0 0.0
    %216 = vmatprep.mubr.f32.mxu0 0.0
    %217 = vmatmul.mubr.f32.gmra.mrb[0].mxu0 %v57
    %v218 = vpop.f32.mrb[0].mxu0
    %v219 = vadd.f32 %v48, %v218
    %v220 = vpop.f32.mrb[0].mxu0
    %v221 = vadd.f32 %v48, %v220
    %222 = vmatprep.mubr.f32.mxu0 0.0
    %223 = vmatmul.mubr.f32.gmra.mrb[0].mxu0 %v60
    %v224 = vpop.f32.mrb[0].mxu0
    %v225 = vadd.f32 %v53, %v224
    %v226 = vpop.f32.mrb[0].mxu0
    %v227 = vadd.f32 %v53, %v226
    %228 = vdwg.mxu0
    %229 = vst [vmem:[#allocation5] sm:$0xff] %v142
    %230 = vst [vmem:[#allocation5 + $0x8] sm:$0xff] %v144
    %231 = vst [vmem:[#allocation5 + $0x10] sm:$0xff] %v219
    %232 = vst [vmem:[#allocation5 + $0x18] sm:$0xff] %v221
    %233 = vst [vmem:[#allocation5 + $0x20] sm:$0x3] %v148
    %234 = vst [vmem:[#allocation5 + $0x28] sm:$0x3] %v150
    %235 = vst [vmem:[#allocation5 + $0x30] sm:$0x3] %v225
    %236 = vst [vmem:[#allocation5 + $0x38] sm:$0x3] %v227
    // Predicated region
    $region18: #{tpu_custom_call.1} parent=1 // pred_check
      _
    $region19: #{tpu_custom_call.1} parent=1 // pred_check_branch
      %238 = sbr.rel (0) target = $region21
    $region20: #{tpu_custom_call.1} parent=1 // pred_region
      %s240 = ssub.s32 1024, 1024
      %241 = vsyncadd [#allocation4], %s240
      %s242 = sshll.u32 [#allocation5], 4
      %s243 = int_to_ptr.vmem [resolvable:$true] %s242
      %248 = dma.vmem_to_hbm [thread:$0]  %s243, 1024, %s3, [#allocation4], 512, 512, 32
    $region21: #{tpu_custom_call.1} parent=1 // pred_fallthru
      _
    // Predicated region
    $region22: #{tpu_custom_call.1} parent=1 // pred_check
      _
    $region23: #{tpu_custom_call.1} parent=1 // pred_check_branch
      %250 = sbr.rel (0) target = $region25
    $region24: #{tpu_custom_call.1} parent=1 // pred_region
      %251 = dma.done [#allocation4], 1024
    $region25: #{tpu_custom_call.1} parent=1 // pred_fallthru
      _
    %252 = vsyncpa [#allocation3], 1
    %253 = vsyncpa [#allocation4], 1

</llo_original>
